<compile_context>
chip_gen: v7x
topology: tpu7x:2x2x1
jax: 0.10.0
libtpu: 0.0.40
codegen_flags: <defaults>
</compile_context>

<pallas_src>
import jax
import jax.numpy as jnp
from jax import lax
from jax.experimental import pallas as pl
from jax.experimental.pallas import tpu as pltpu


def _logreg_kernel(x_ref, w_ref, b_ref, o_ref):
    # x_ref: (TB, D)   w_ref: (C_pad, D)   b_ref: (1, C_pad)   o_ref: (TB, C_pad)
    logits = lax.dot_general(
        x_ref[...], w_ref[...],
        dimension_numbers=(((1,), (1,)), ((), ())),   # contract D of x with D of W
        preferred_element_type=jnp.float32,
    )
    logits = logits + b_ref[...]                      # broadcast (1, C_pad) over rows
    o_ref[...] = jax.nn.sigmoid(logits).astype(o_ref.dtype)


def _round_up(n, m):
    return ((n + m - 1) // m) * m


def logistic_regression(x, weight, bias, *, tb_max=1024):
    """x: (B, D) f32, weight: (C, D) f32, bias: (C,) f32 -> (B, C) f32."""
    B, D = x.shape
    C = weight.shape[0]

    # Lane-dense class dimension (multiple of 128).
    C_pad = max(128, _round_up(C, 128))

    # Pick batch tile TB from a VMEM budget: resident W/bias + 2 buffers of
    # the x and out tiles.  Target well under the 32 MiB scoped limit.
    vmem_budget = 24 * 1024 * 1024
    resident_bytes = (C_pad * D + C_pad) * 4
    per_row_bytes = 2 * (D + C_pad) * 4
    tb = max(8, (vmem_budget - resident_bytes) // per_row_bytes)
    tb = min(tb, tb_max, _round_up(B, 8))
    tb = max(8, (tb // 8) * 8)

    B_pad = _round_up(B, tb)

    # Pad inputs (zeros) so block shapes tile exactly; padded rows/cols are
    # sliced off the result.
    x_p = x if B_pad == B else jnp.pad(x, ((0, B_pad - B), (0, 0)))
    w_p = weight if C_pad == C else jnp.pad(weight, ((0, C_pad - C), (0, 0)))
    b_p = bias if C_pad == C else jnp.pad(bias, (0, C_pad - C))
    b2 = b_p.reshape(1, C_pad)

    grid = (B_pad // tb,)

    out = pl.pallas_call(
        _logreg_kernel,
        out_shape=jax.ShapeDtypeStruct((B_pad, C_pad), x.dtype),
        grid_spec=pltpu.PrefetchScalarGridSpec(
            num_scalar_prefetch=0,
            grid=grid,
            in_specs=[
                pl.BlockSpec((tb, D), lambda i: (i, 0)),       # x tile marches over batch
                pl.BlockSpec((C_pad, D), lambda i: (0, 0)),    # W resident in VMEM
                pl.BlockSpec((1, C_pad), lambda i: (0, 0)),    # bias resident in VMEM
            ],
            out_specs=pl.BlockSpec((tb, C_pad), lambda i: (i, 0)),
        ),
        compiler_params=pltpu.CompilerParams(
            dimension_semantics=("parallel",),
            vmem_limit_bytes=64 * 1024 * 1024,
        ),
    )(x_p, w_p, b2)

    return out[:B, :C]


if __name__ == "__main__":
    key = jax.random.PRNGKey(0)
    kx, kw, kb, kx2 = jax.random.split(key, 4)

    batch, input_size, num_classes = 8, 32, 8

    x = jax.random.normal(kx, (batch, input_size), dtype=jnp.float32)
    # Deterministic parameter init (mimics nn.Linear uniform(-1/sqrt(D), 1/sqrt(D)))
    bound = 1.0 / (input_size ** 0.5)
    weight = jax.random.uniform(kw, (num_classes, input_size),
                                minval=-bound, maxval=bound, dtype=jnp.float32)
    bias = jax.random.uniform(kb, (num_classes,),
                              minval=-bound, maxval=bound, dtype=jnp.float32)

    out = logistic_regression(x, weight, bias)
    out = jax.block_until_ready(out)

    ref = jax.nn.sigmoid(x @ weight.T + bias)
    assert out.shape == (batch, num_classes)
    assert jnp.allclose(out, ref, atol=1e-5, rtol=1e-5)

    # Second check: ragged batch (exercises batch padding + multi-tile grid).
    batch2 = 22
    x2 = jax.random.normal(kx2, (batch2, input_size), dtype=jnp.float32)
    out2 = jax.block_until_ready(logistic_regression(x2, weight, bias, tb_max=8))
    ref2 = jax.nn.sigmoid(x2 @ weight.T + bias)
    assert out2.shape == (batch2, num_classes)
    assert jnp.allclose(out2, ref2, atol=1e-5, rtol=1e-5)

    print("KERNEL_OK")
</pallas_src>

<mosaic_0001>
module attributes {stable_mosaic.version = 11 : i64} {
  func.func @_logreg_kernel(%arg0: i32, %arg1: memref<8x32xf32, #tpu.memory_space<vmem>>, %arg2: memref<128x32xf32, #tpu.memory_space<vmem>>, %arg3: memref<1x128xf32, #tpu.memory_space<vmem>>, %arg4: memref<8x128xf32, #tpu.memory_space<vmem>>) attributes {dimension_semantics = [#tpu.dimension_semantics<parallel>], iteration_bounds = array<i64: 1>, scalar_prefetch = 0 : i64, scratch_operands = 0 : i64, tpu.core_type = #tpu.core_type<tc>, window_params = [{transform_indices = @transform_0, window_bounds = array<i64: 8, 32>}, {pipeline_mode = #tpu.pipeline_mode<synchronous>, transform_indices = @transform_1, window_bounds = array<i64: 128, 32>}, {pipeline_mode = #tpu.pipeline_mode<synchronous>, transform_indices = @transform_2, window_bounds = array<i64: 1, 128>}, {transform_indices = @transform_3, window_bounds = array<i64: 8, 128>}]} {
    %c0 = arith.constant 0 : index
    %c0_0 = arith.constant 0 : index
    %0 = vector.load %arg1[%c0, %c0_0] : memref<8x32xf32, #tpu.memory_space<vmem>>, vector<8x32xf32>
    %c0_1 = arith.constant 0 : index
    %c0_2 = arith.constant 0 : index
    %1 = vector.load %arg2[%c0_1, %c0_2] : memref<128x32xf32, #tpu.memory_space<vmem>>, vector<128x32xf32>
    %cst = arith.constant dense<0.000000e+00> : vector<8x128xf32>
    %2 = tpu.matmul %0, %1, %cst {dimension_numbers = #tpu.dot_dimension_numbers<[1], [1], [0], [0], [0, 0, 1, 0], [], []>} : vector<8x32xf32>, vector<128x32xf32>, vector<8x128xf32> -> vector<8x128xf32>
    %c0_3 = arith.constant 0 : index
    %c0_4 = arith.constant 0 : index
    %3 = vector.load %arg3[%c0_3, %c0_4] : memref<1x128xf32, #tpu.memory_space<vmem>>, vector<1x128xf32>
    %4 = vector.broadcast %3 : vector<1x128xf32> to vector<8x128xf32>
    %5 = arith.addf %2, %4 : vector<8x128xf32>
    %6 = arith.negf %5 : vector<8x128xf32>
    %7 = math.exp %6 : vector<8x128xf32>
    %cst_5 = arith.constant 1.000000e+00 : f32
    %8 = vector.broadcast %cst_5 : f32 to vector<8x128xf32>
    %9 = arith.addf %8, %7 : vector<8x128xf32>
    %10 = arith.divf %8, %9 : vector<8x128xf32>
    %c0_6 = arith.constant 0 : index
    %c0_7 = arith.constant 0 : index
    %11 = vector.load %arg4[%c0_6, %c0_7] : memref<8x128xf32, #tpu.memory_space<vmem>>, vector<8x128xf32>
    tpu.vector_store %arg4[%c0_6, %c0_7], %10 {strides = array<i32>} : memref<8x128xf32, #tpu.memory_space<vmem>>, vector<8x128xf32>,
    return
  }
  func.func @transform_0(%arg0: i32) -> (i32, i32) {
    %c0_i32 = arith.constant 0 : i32
    %c0_i32_0 = arith.constant 0 : i32
    return %arg0, %c0_i32 : i32, i32
  }
  func.func @transform_1(%arg0: i32) -> (i32, i32) {
    %c0_i32 = arith.constant 0 : i32
    %c0_i32_0 = arith.constant 0 : i32
    %c0_i32_1 = arith.constant 0 : i32
    return %c0_i32, %c0_i32_0 : i32, i32
  }
  func.func @transform_2(%arg0: i32) -> (i32, i32) {
    %c0_i32 = arith.constant 0 : i32
    %c0_i32_0 = arith.constant 0 : i32
    %c0_i32_1 = arith.constant 0 : i32
    return %c0_i32, %c0_i32_0 : i32, i32
  }
  func.func @transform_3(%arg0: i32) -> (i32, i32) {
    %c0_i32 = arith.constant 0 : i32
    %c0_i32_0 = arith.constant 0 : i32
    return %arg0, %c0_i32 : i32, i32
  }
}

</mosaic_0001>

<llo_original>
// kernel: tpu_custom_call.1
$region0: #{tpu_custom_call.1}
  #allocation0 [shape = 'u32[]', space=smem, size = 0x4, offset = 0x4, fixed_abs, tag = 'smem constant byte address 0x4 - core index']
  #allocation1 [shape = 'u32[144,128]{1,0:T(1,128)}', space=vmem, size = 0x12000, scoped, tag = 'internal scratch']
  %s0 = inlined_call_operand.hbm [shape: f32[8,32], index: 0, kind: input, shape index: {}]
  %s1 = inlined_call_operand.hbm [shape: f32[128,32], index: 1, kind: input, shape index: {}]
  %s2 = inlined_call_operand.hbm [shape: f32[1,128], index: 2, kind: input, shape index: {}]
  %s3 = inlined_call_operand.hbm [shape: f32[8,128], index: 3, kind: output, shape index: {}]
  %s4 = sld [smem:[#allocation0]]
  $region34: #{tpu_custom_call.1} parent=0
    _
  %s6 = ssub.s32 1, %s4
  %s7 = scalar_select 0, %s6, %s4
  $region1: #{tpu_custom_call.1} parent=0
    #allocation2 [shape = 'u8[4096]{0}', space=vmem, size = 0x1000, scoped, tag = 'input window, operand 0, single buffered']
    #allocation3 [shape = 's32[1]{0}', space=sflag, size = 0x4, scoped, tag = 'scoped memory for tpu_custom_call.1']
    #allocation4 [shape = 's32[1]{0}', space=sflag, size = 0x4, scoped, tag = 'scoped memory for tpu_custom_call.1']
    #allocation5 [shape = 'u8[65536]{0}', space=vmem, size = 0x10000, scoped, tag = 'input window, operand 1, single buffered']
    #allocation6 [shape = 's32[1]{0}', space=sflag, size = 0x4, scoped, tag = 'scoped memory for tpu_custom_call.1']
    #allocation7 [shape = 'u8[512]{0}', space=vmem, size = 0x400, scoped, tag = 'input window, operand 2, single buffered']
    #allocation8 [shape = 'u8[4096]{0}', space=vmem, size = 0x1000, scoped, tag = 'output window, operand 0, single buffered']
    %8 = vsyncpa [#allocation3], 0
    %9 = vsyncpa [#allocation6], 0
    %10 = vsyncpa [#allocation4], 0
    // Predicated region
    $region2: #{tpu_custom_call.1} parent=1 // pred_check
      _
    $region3: #{tpu_custom_call.1} parent=1 // pred_check_branch
      %12 = sbr.rel (0) target = $region5
    $region4: #{tpu_custom_call.1} parent=1 // pred_region
      %s14 = ssub.s32 128, 128
      %15 = vsyncadd [#allocation3], %s14
      %s17 = sshll.u32 [#allocation2], 4
      %s18 = int_to_ptr.vmem [resolvable:$true] %s17
      %20 = dma.hbm_to_vmem [thread:$0]  %s0, 128, %s18, [#allocation3]
    $region5: #{tpu_custom_call.1} parent=1 // pred_fallthru
      _
    // Predicated region
    $region6: #{tpu_custom_call.1} parent=1 // pred_check
      _
    $region7: #{tpu_custom_call.1} parent=1 // pred_check_branch
      %22 = sbr.rel (0) target = $region9
    $region8: #{tpu_custom_call.1} parent=1 // pred_region
      %s24 = ssub.s32 2048, 2048
      %25 = vsyncadd [#allocation6], %s24
      %s26 = sshll.u32 [#allocation5], 4
      %s27 = int_to_ptr.vmem [resolvable:$true] %s26
      %32 = dma.hbm_to_vmem [thread:$0]  %s1, 2048, %s27, [#allocation6], 128, 128, 8
    $region9: #{tpu_custom_call.1} parent=1 // pred_fallthru
      _
    // Predicated region
    $region10: #{tpu_custom_call.1} parent=1 // pred_check
      _
    $region11: #{tpu_custom_call.1} parent=1 // pred_check_branch
      %34 = sbr.rel (0) target = $region13
    $region12: #{tpu_custom_call.1} parent=1 // pred_region
      %s36 = ssub.s32 16, 16
      %37 = vsyncadd [#allocation6], %s36
      %s39 = sshll.u32 [#allocation7], 4
      %s40 = int_to_ptr.vmem [resolvable:$true] %s39
      %42 = dma.hbm_to_vmem [thread:$0]  %s2, 16, %s40, [#allocation6]
    $region13: #{tpu_custom_call.1} parent=1 // pred_fallthru
      _
    // Predicated region
    $region14: #{tpu_custom_call.1} parent=1 // pred_check
      _
    $region15: #{tpu_custom_call.1} parent=1 // pred_check_branch
      %44 = sbr.rel (0) target = $region17
    $region16: #{tpu_custom_call.1} parent=1 // pred_region
      %45 = dma.done [#allocation3], 128
    $region17: #{tpu_custom_call.1} parent=1 // pred_fallthru
      _
    // Predicated region
    $region18: #{tpu_custom_call.1} parent=1 // pred_check
      _
    $region19: #{tpu_custom_call.1} parent=1 // pred_check_branch
      %47 = sbr.rel (0) target = $region21
    $region20: #{tpu_custom_call.1} parent=1 // pred_region
      %48 = dma.done [#allocation6], 2048
    $region21: #{tpu_custom_call.1} parent=1 // pred_fallthru
      _
    // Predicated region
    $region22: #{tpu_custom_call.1} parent=1 // pred_check
      _
    $region23: #{tpu_custom_call.1} parent=1 // pred_check_branch
      %50 = sbr.rel (0) target = $region25
    $region24: #{tpu_custom_call.1} parent=1 // pred_region
      %51 = dma.done [#allocation6], 16
    $region25: #{tpu_custom_call.1} parent=1 // pred_fallthru
      _
    %v52 = vld [vmem:[#allocation2] sm:$0xff]
    %v53 = vld [vmem:[#allocation5] sm:$0xff]
    %v54 = vld [vmem:[#allocation5 + $0x8] sm:$0xff]
    %v55 = vld [vmem:[#allocation5 + $0x10] sm:$0xff]
    %v56 = vld [vmem:[#allocation5 + $0x18] sm:$0xff]
    %v57 = vld [vmem:[#allocation5 + $0x20] sm:$0xff]
    %v58 = vld [vmem:[#allocation5 + $0x28] sm:$0xff]
    %v59 = vld [vmem:[#allocation5 + $0x30] sm:$0xff]
    %v60 = vld [vmem:[#allocation5 + $0x38] sm:$0xff]
    %v61 = vld [vmem:[#allocation5 + $0x40] sm:$0xff]
    %v62 = vld [vmem:[#allocation5 + $0x48] sm:$0xff]
    %v63 = vld [vmem:[#allocation5 + $0x50] sm:$0xff]
    %v64 = vld [vmem:[#allocation5 + $0x58] sm:$0xff]
    %v65 = vld [vmem:[#allocation5 + $0x60] sm:$0xff]
    %v66 = vld [vmem:[#allocation5 + $0x68] sm:$0xff]
    %v67 = vld [vmem:[#allocation5 + $0x70] sm:$0xff]
    %v68 = vld [vmem:[#allocation5 + $0x78] sm:$0xff]
    %v69 = vld [vmem:[#allocation7] sm:$0x1]
    %v71 = vlaneseq
    %v72 = vshrl.u32 %v71, 7
    %v73 = vsub.s32 0, %v72
    %v74 = vrot.slane %v69, %v73
    %vm76 = vcmask 261120
    %v78 = vsel %vm76, %v52, 0
    %v81 = vsel %vm76, %v53, 0
    %v84 = vsel %vm76, %v54, 0
    %v87 = vsel %vm76, %v55, 0
    %v90 = vsel %vm76, %v56, 0
    %v93 = vsel %vm76, %v57, 0
    %v96 = vsel %vm76, %v58, 0
    %v99 = vsel %vm76, %v59, 0
    %v102 = vsel %vm76, %v60, 0
    %v105 = vsel %vm76, %v61, 0
    %v108 = vsel %vm76, %v62, 0
    %v111 = vsel %vm76, %v63, 0
    %v114 = vsel %vm76, %v64, 0
    %v117 = vsel %vm76, %v65, 0
    %v120 = vsel %vm76, %v66, 0
    %v123 = vsel %vm76, %v67, 0
    %v126 = vsel %vm76, %v68, 0
    %128 = vmatprep.subr.mxu0 0.0
    %129 = vmatpush1.xpose.msra.mxu0 %v81
    %130 = vmatprep.subr.mxu0 0.0
    %131 = vmatpush1.xpose.msra.mxu0 %v84
    %132 = vmatprep.subr.mxu0 0.0
    %133 = vmatpush1.xpose.msra.mxu0 %v87
    %134 = vmatprep.subr.mxu0 0.0
    %135 = vmatpush1.xpose.msra.mxu0 %v90
    %136 = vmatprep.subr.mxu0 0.0
    %137 = vmatpush1.xpose.msra.mxu0 %v93
    %138 = vmatprep.subr.mxu0 0.0
    %139 = vmatpush1.xpose.msra.mxu0 %v96
    %140 = vmatprep.subr.mxu0 0.0
    %141 = vmatpush1.xpose.msra.mxu0 %v99
    %142 = vmatprep.subr.mxu0 0.0
    %143 = vmatpush1.xpose.msra.mxu0 %v102
    %144 = vmatprep.subr.mxu0 0.0
    %145 = vmatpush1.xpose.msra.mxu0 %v105
    %146 = vmatprep.subr.mxu0 0.0
    %147 = vmatpush1.xpose.msra.mxu0 %v108
    %148 = vmatprep.subr.mxu0 0.0
    %149 = vmatpush1.xpose.msra.mxu0 %v111
    %150 = vmatprep.subr.mxu0 0.0
    %151 = vmatpush1.xpose.msra.mxu0 %v114
    %152 = vmatprep.subr.mxu0 0.0
    %153 = vmatpush1.xpose.msra.mxu0 %v117
    %154 = vmatprep.subr.mxu0 0.0
    %155 = vmatpush1.xpose.msra.mxu0 %v120
    %156 = vmatprep.subr.mxu0 0.0
    %157 = vmatpush1.xpose.msra.mxu0 %v123
    %158 = vmatprep.subr.mxu0 0.0
    %159 = vmatpush1.xpose.msra.mxu0 %v126
    %160 = vmatprep.subr.mxu0 0.0
    %161 = vmatpush1.xpose.msra.mxu0 0.0
    %162 = vmatprep.subr.mxu0 0.0
    %163 = vmatpush1.xpose.msra.mxu0 0.0
    %164 = vmatprep.subr.mxu0 0.0
    %165 = vmatpush1.xpose.msra.mxu0 0.0
    %166 = vmatprep.subr.mxu0 0.0
    %167 = vmatpush1.xpose.msra.mxu0 0.0
    %168 = vmatprep.subr.mxu0 0.0
    %169 = vmatpush1.xpose.msra.mxu0 0.0
    %170 = vmatprep.subr.mxu0 0.0
    %171 = vmatpush1.xpose.msra.mxu0 0.0
    %172 = vmatprep.subr.mxu0 0.0
    %173 = vmatpush1.xpose.msra.mxu0 0.0
    %174 = vmatprep.subr.mxu0 0.0
    %175 = vmatpush1.xpose.msra.mxu0 0.0
    %176 = vmatprep.subr.mxu0 0.0
    %177 = vmatpush1.xpose.msra.mxu0 0.0
    %178 = vmatprep.subr.mxu0 0.0
    %179 = vmatpush1.xpose.msra.mxu0 0.0
    %180 = vmatprep.subr.mxu0 0.0
    %181 = vmatpush1.xpose.msra.mxu0 0.0
    %182 = vmatprep.subr.mxu0 0.0
    %183 = vmatpush1.xpose.msra.mxu0 0.0
    %184 = vmatprep.subr.mxu0 0.0
    %185 = vmatpush1.xpose.msra.mxu0 0.0
    %186 = vmatprep.subr.mxu0 0.0
    %187 = vmatpush1.xpose.msra.mxu0 0.0
    %188 = vmatprep.subr.mxu0 0.0
    %189 = vmatpush1.xpose.msra.mxu0 0.0
    %190 = vmatprep.subr.mxu0 0.0
    %191 = vmatpush1.xpose.msra.mxu0 0.0
    %192 = vmatprep.mubr.f32.mxu0 0.0
    %193 = vmatmul.mubr.f32.gmra.mrb[0].mxu0 %v78
    %v194 = vpop.f32.mrb[0].mxu0
    %v195 = vadd.f32 %v74, %v194
    %v196 = vpop.f32.mrb[0].mxu0
    %197 = vdwg.mxu0
    %v198 = vxor.u32 %v195, 2147483648
    %v199 = vmul.f32 %v198, 1.442695
    %v200 = vpow.pop %v199
    %v201 = vadd.f32 %v200, 1.0
    %v202 = vrcp.pop %v201
    %v203 = vmul.f32 1.0, %v202
    %204 = vst [vmem:[#allocation8] sm:$0xff] %v203
    // Predicated region
    $region26: #{tpu_custom_call.1} parent=1 // pred_check
      _
    $region27: #{tpu_custom_call.1} parent=1 // pred_check_branch
      %206 = sbr.rel (0) target = $region29
    $region28: #{tpu_custom_call.1} parent=1 // pred_region
      %s208 = ssub.s32 128, 128
      %209 = vsyncadd [#allocation4], %s208
      %s211 = sshll.u32 [#allocation8], 4
      %s212 = int_to_ptr.vmem [resolvable:$true] %s211
      %214 = dma.vmem_to_hbm [thread:$0]  %s212, 128, %s3, [#allocation4]
    $region29: #{tpu_custom_call.1} parent=1 // pred_fallthru
      _
    // Predicated region
    $region30: #{tpu_custom_call.1} parent=1 // pred_check
      _
    $region31: #{tpu_custom_call.1} parent=1 // pred_check_branch
      %216 = sbr.rel (0) target = $region33
    $region32: #{tpu_custom_call.1} parent=1 // pred_region
      %217 = dma.done [#allocation4], 128
    $region33: #{tpu_custom_call.1} parent=1 // pred_fallthru
      _
    %218 = vsyncpa [#allocation3], 1
    %219 = vsyncpa [#allocation6], 1
    %220 = vsyncpa [#allocation4], 1

</llo_original>
